<compile_context>
chip_gen: v6e
topology: v6e:2x2x1
jax: 0.10.0
libtpu: 0.0.40
codegen_flags: <defaults>
</compile_context>

<pallas_src>
import math

import jax
import jax.numpy as jnp
from jax.experimental import pallas as pl
from jax.experimental.pallas import tpu as pltpu

# SELU constants (match torch.nn.SELU)
_SELU_ALPHA = 1.6732632423543772
_SELU_SCALE = 1.0507009873554805


def _selu(x):
    # Clamp the exp argument so the unselected branch never produces inf.
    neg = _SELU_ALPHA * (jnp.exp(jnp.minimum(x, 0.0)) - 1.0)
    return _SELU_SCALE * jnp.where(x > 0, x, neg)


def _round_up(x, m):
    return ((x + m - 1) // m) * m


def _cdiv(a, b):
    return -(-a // b)


def _block_diag(a, b):
    ra, ca = a.shape
    rb, cb = b.shape
    top = jnp.concatenate([a, jnp.zeros((ra, cb), a.dtype)], axis=1)
    bot = jnp.concatenate([jnp.zeros((rb, ca), b.dtype), b], axis=1)
    return jnp.concatenate([top, bot], axis=0)


def _graph_gather_kernel(
    cat_ref,   # [TB*N_pad, 2F]   compute dtype (bf16); hidden already masked
    w1_ref,    # [2F, H2]         [[aw1_hid | ew1], [aw1_inp | 0]]
    w2_ref,    # [H2, H2]         blockdiag(aw2, ew2)
    w3_ref,    # [H2, 2*O_pad]    blockdiag(aw3_pad, ew3_pad)
    out_ref,   # [TB, O_pad]      f32
):
    rows = cat_ref.shape[0]
    tb, o_pad = out_ref.shape
    n = rows // tb
    cdt = cat_ref.dtype

    # --- fused layer 1: cols [0:Ha] = att layer 1, cols [Ha:H2] = emb layer 1
    x = _selu(jnp.dot(cat_ref[...], w1_ref[...],
                      preferred_element_type=jnp.float32))
    # --- fused layer 2 (block-diagonal weight keeps the two branches separate)
    x = _selu(jnp.dot(x.astype(cdt), w2_ref[...],
                      preferred_element_type=jnp.float32))
    # --- fused layer 3 -> [rows, 2*O_pad]: [energies | embedding]
    y = jnp.dot(x.astype(cdt), w3_ref[...], preferred_element_type=jnp.float32)

    energies = y[:, :o_pad]
    # Numerically-stable sigmoid (exp argument always <= 0); reciprocal on EUP.
    # Masked / padded nodes have an exactly-zero embedding (no-bias FFN on a
    # zeroed hidden row), so their attention value is irrelevant.
    z = jnp.exp(-jnp.abs(energies))
    attention = jnp.where(energies >= 0.0, 1.0, z) * pl.reciprocal(1.0 + z,
                                                                   approx=True)

    prod = attention * y[:, o_pad:]                    # [rows, O_pad], f32
    # rows = TB * N_pad with N_pad a multiple of 8 -> free sublane regroup.
    out_ref[...] = jnp.sum(prod.reshape(tb, n, o_pad), axis=1)


def graph_gather(hidden_nodes, input_nodes, node_mask, params,
                 compute_dtype=jnp.bfloat16, target_rows=2048):
    """GraphGather forward. Returns [B, out_features] (f32)."""
    B, N, F = hidden_nodes.shape
    aw1, aw2, aw3 = params["att_w1"], params["att_w2"], params["att_w3"]
    ew1, ew2, ew3 = params["emb_w1"], params["emb_w2"], params["emb_w3"]
    Ha, He, O = aw2.shape[0], ew2.shape[0], aw3.shape[1]
    H2 = Ha + He
    O_pad = _round_up(O, 128)      # lane-dense output (unmasked stores)
    N_pad = _round_up(N, 8)        # keep the reduce reshape tile-aligned

    # --- graphs per grid step: aim for ~target_rows matmul rows per step to
    #     amortize pipeline overhead, but keep the grid >= 2 steps when B
    #     allows it so both v7x TensorCores get work.
    TB = max(8, _round_up(_cdiv(target_rows, N_pad), 8))
    TB = min(TB, max(8, _round_up(_cdiv(B, 2), 8)))
    B_pad = _round_up(B, TB)
    G = B_pad // TB
    rows = TB * N_pad

    # --- fused, lane-dense weights (built in f32, cast to compute dtype) ---
    w1_top = jnp.concatenate([aw1[:F, :], ew1], axis=1)                       # hidden half
    w1_bot = jnp.concatenate([aw1[F:, :], jnp.zeros((F, He), aw1.dtype)], 1)  # input half
    w1f = jnp.concatenate([w1_top, w1_bot], axis=0)                           # [2F, H2]
    w2f = _block_diag(aw2, ew2)                                               # [H2, H2]
    aw3p = jnp.pad(aw3, ((0, 0), (0, O_pad - O)))
    ew3p = jnp.pad(ew3, ((0, 0), (0, O_pad - O)))
    w3f = _block_diag(aw3p, ew3p)                                             # [H2, 2*O_pad]
    w1f, w2f, w3f = (w.astype(compute_dtype) for w in (w1f, w2f, w3f))

    # --- mask folded into hidden: zero hidden rows -> exactly-zero embedding
    #     (no-bias FFN), so masked / padded nodes contribute exactly 0, which
    #     matches sigmoid(x - 1e6) == 0 in the reference.
    keep = (node_mask != 0).astype(hidden_nodes.dtype)[..., None]   # [B, N, 1]
    cat = jnp.concatenate([hidden_nodes * keep, input_nodes], axis=2)  # [B, N, 2F]
    cat = jnp.pad(cat, ((0, B_pad - B), (0, N_pad - N), (0, 0)))
    cat = cat.reshape(B_pad * N_pad, 2 * F).astype(compute_dtype)
    # TODO(synk): wrapper-side pad/concat/cast is a separate XLA pass over the
    # node tensors; allow_input_fusion could fold it into the input pipeline.

    itemsize = jnp.dtype(compute_dtype).itemsize
    total_rows = B_pad * N_pad
    flops = int(2 * total_rows * (2 * F * H2 + H2 * H2 + H2 * 2 * O_pad)
                + 4 * total_rows * O_pad)
    transcendentals = int(total_rows * (2 * H2 + 2 * O_pad))
    bytes_accessed = int(total_rows * 2 * F * itemsize
                         + (w1f.size + w2f.size + w3f.size) * itemsize
                         + B_pad * O_pad * 4)

    full = lambda shape: pl.BlockSpec(shape, lambda b: (0,) * len(shape))

    out = pl.pallas_call(
        _graph_gather_kernel,
        out_shape=jax.ShapeDtypeStruct((B_pad, O_pad), jnp.float32),
        grid_spec=pltpu.PrefetchScalarGridSpec(
            num_scalar_prefetch=0,
            grid=(G,),
            in_specs=[
                pl.BlockSpec((rows, 2 * F), lambda b: (b, 0)),   # [hidden|input]
                full(w1f.shape), full(w2f.shape), full(w3f.shape),
            ],
            out_specs=pl.BlockSpec((TB, O_pad), lambda b: (b, 0)),
        ),
        compiler_params=pltpu.CompilerParams(
            dimension_semantics=("parallel",),
            vmem_limit_bytes=32 * 1024 * 1024,
        ),
        cost_estimate=pl.CostEstimate(
            flops=flops,
            transcendentals=transcendentals,
            bytes_accessed=bytes_accessed,
        ),
    )(cat, w1f, w2f, w3f)

    return out[:B, :O]


def init_params(key, node_features, out_features,
                att_depth=2, att_hidden_dim=64,
                emb_depth=2, emb_hidden_dim=64):
    """Deterministic init mirroring FeedForwardNetwork (SELU init, no bias).
    Weights stored as [in, out]."""
    def make_ffnn(key, sizes):
        ws = []
        for i in range(len(sizes) - 1):
            key, sub = jax.random.split(key)
            std = math.sqrt(1.0 / sizes[i])
            ws.append(std * jax.random.normal(sub, (sizes[i], sizes[i + 1]),
                                              dtype=jnp.float32))
        return key, ws

    att_sizes = [node_features * 2] + [att_hidden_dim] * att_depth + [out_features]
    emb_sizes = [node_features] + [emb_hidden_dim] * emb_depth + [out_features]
    key, att_ws = make_ffnn(key, att_sizes)
    key, emb_ws = make_ffnn(key, emb_sizes)
    return {
        "att_w1": att_ws[0], "att_w2": att_ws[1], "att_w3": att_ws[2],
        "emb_w1": emb_ws[0], "emb_w2": emb_ws[1], "emb_w3": emb_ws[2],
    }


def graph_gather_reference(hidden_nodes, input_nodes, node_mask, params,
                           compute_dtype=jnp.float32):
    """Pure-JAX reference (mirrors the PyTorch forward; optional bf16 operands
    with f32 accumulation to match the kernel's compute dtype)."""
    cdt = compute_dtype
    cat = jnp.concatenate([hidden_nodes, input_nodes], axis=2)
    energy_mask = (node_mask == 0).astype(jnp.float32) * 1e6

    def ffnn(x, w1, w2, w3):
        x = _selu(jnp.dot(x.astype(cdt), w1.astype(cdt),
                          preferred_element_type=jnp.float32))
        x = _selu(jnp.dot(x.astype(cdt), w2.astype(cdt),
                          preferred_element_type=jnp.float32))
        return jnp.dot(x.astype(cdt), w3.astype(cdt),
                       preferred_element_type=jnp.float32)

    energies = ffnn(cat, params["att_w1"], params["att_w2"], params["att_w3"])
    energies = energies - energy_mask[..., None]
    attention = jax.nn.sigmoid(energies)
    embedding = ffnn(hidden_nodes, params["emb_w1"], params["emb_w2"],
                     params["emb_w3"])
    return jnp.sum(attention * embedding, axis=1)


def _run_case(key, B, N, F, O):
    k1, k2, k3, kp = jax.random.split(key, 4)
    hidden_nodes = jax.random.normal(k1, (B, N, F), dtype=jnp.float32)
    input_nodes = jax.random.normal(k2, (B, N, F), dtype=jnp.float32)
    node_mask = (jax.random.uniform(k3, (B, N)) > 0.25).astype(jnp.float32)

    params = init_params(kp, node_features=F, out_features=O,
                         att_depth=2, att_hidden_dim=64,
                         emb_depth=2, emb_hidden_dim=64)

    out = graph_gather(hidden_nodes, input_nodes, node_mask, params)
    out = jax.block_until_ready(out)

    ref = graph_gather_reference(hidden_nodes, input_nodes, node_mask, params,
                                 compute_dtype=jnp.bfloat16)
    assert out.shape == (B, O), out.shape
    assert jnp.allclose(out, ref, atol=2e-2, rtol=2e-2), \
        f"max abs err {jnp.max(jnp.abs(out - ref))}"


if __name__ == "__main__":
    key = jax.random.PRNGKey(0)
    ka, kb = jax.random.split(key)

    # Small shapes consistent with the module.
    _run_case(ka, B=2, N=8, F=16, O=32)
    # Exercises B/N padding and a >=2-step grid (both v7x TCs get work).
    _run_case(kb, B=20, N=10, F=16, O=32)

    print("KERNEL_OK")
</pallas_src>

<mosaic_0001>
module attributes {stable_mosaic.version = 11 : i64} {
  func.func @_graph_gather_kernel(%arg0: i32, %arg1: memref<64x32xbf16, #tpu.memory_space<vmem>>, %arg2: memref<32x128xbf16, #tpu.memory_space<vmem>>, %arg3: memref<128x128xbf16, #tpu.memory_space<vmem>>, %arg4: memref<128x256xbf16, #tpu.memory_space<vmem>>, %arg5: memref<8x128xf32, #tpu.memory_space<vmem>>) attributes {dimension_semantics = [#tpu.dimension_semantics<parallel>], iteration_bounds = array<i64: 1>, scalar_prefetch = 0 : i64, scratch_operands = 0 : i64, tpu.core_type = #tpu.core_type<tc>, window_params = [{transform_indices = @transform_0, window_bounds = array<i64: 64, 32>}, {pipeline_mode = #tpu.pipeline_mode<synchronous>, transform_indices = @transform_1, window_bounds = array<i64: 32, 128>}, {pipeline_mode = #tpu.pipeline_mode<synchronous>, transform_indices = @transform_2, window_bounds = array<i64: 128, 128>}, {pipeline_mode = #tpu.pipeline_mode<synchronous>, transform_indices = @transform_3, window_bounds = array<i64: 128, 256>}, {transform_indices = @transform_4, window_bounds = array<i64: 8, 128>}]} {
    %c0 = arith.constant 0 : index
    %c0_0 = arith.constant 0 : index
    %0 = vector.load %arg1[%c0, %c0_0] : memref<64x32xbf16, #tpu.memory_space<vmem>>, vector<64x32xbf16>
    %c0_1 = arith.constant 0 : index
    %c0_2 = arith.constant 0 : index
    %1 = vector.load %arg2[%c0_1, %c0_2] : memref<32x128xbf16, #tpu.memory_space<vmem>>, vector<32x128xbf16>
    %cst = arith.constant dense<0.000000e+00> : vector<64x128xf32>
    %2 = tpu.matmul %0, %1, %cst {dimension_numbers = #tpu.dot_dimension_numbers<[1], [0], [0], [1], [0, 0, 1, 1], [], []>} : vector<64x32xbf16>, vector<32x128xbf16>, vector<64x128xf32> -> vector<64x128xf32>
    %cst_3 = arith.constant 0.000000e+00 : f32
    %3 = vector.broadcast %cst_3 : f32 to vector<64x128xf32>
    %4 = arith.minimumf %2, %3 : vector<64x128xf32>
    %5 = math.exp %4 : vector<64x128xf32>
    %cst_4 = arith.constant 1.000000e+00 : f32
    %6 = vector.broadcast %cst_4 : f32 to vector<64x128xf32>
    %7 = arith.subf %5, %6 : vector<64x128xf32>
    %cst_5 = arith.constant 1.67326319 : f32
    %8 = vector.broadcast %cst_5 : f32 to vector<64x128xf32>
    %9 = arith.mulf %8, %7 : vector<64x128xf32>
    %cst_6 = arith.constant 0.000000e+00 : f32
    %10 = vector.broadcast %cst_6 : f32 to vector<64x128xf32>
    %11 = arith.cmpf ogt, %2, %10 : vector<64x128xf32>
    %12 = arith.select %11, %2, %9 : vector<64x128xi1>, vector<64x128xf32>
    %cst_7 = arith.constant 1.05070102 : f32
    %13 = vector.broadcast %cst_7 : f32 to vector<64x128xf32>
    %14 = arith.mulf %13, %12 : vector<64x128xf32>
    %15 = arith.truncf %14 : vector<64x128xf32> to vector<64x128xbf16>
    %c0_8 = arith.constant 0 : index
    %c0_9 = arith.constant 0 : index
    %16 = vector.load %arg3[%c0_8, %c0_9] : memref<128x128xbf16, #tpu.memory_space<vmem>>, vector<128x128xbf16>
    %cst_10 = arith.constant dense<0.000000e+00> : vector<64x128xf32>
    %17 = tpu.matmul %15, %16, %cst_10 {dimension_numbers = #tpu.dot_dimension_numbers<[1], [0], [0], [1], [0, 0, 1, 1], [], []>} : vector<64x128xbf16>, vector<128x128xbf16>, vector<64x128xf32> -> vector<64x128xf32>
    %cst_11 = arith.constant 0.000000e+00 : f32
    %18 = vector.broadcast %cst_11 : f32 to vector<64x128xf32>
    %19 = arith.minimumf %17, %18 : vector<64x128xf32>
    %20 = math.exp %19 : vector<64x128xf32>
    %cst_12 = arith.constant 1.000000e+00 : f32
    %21 = vector.broadcast %cst_12 : f32 to vector<64x128xf32>
    %22 = arith.subf %20, %21 : vector<64x128xf32>
    %cst_13 = arith.constant 1.67326319 : f32
    %23 = vector.broadcast %cst_13 : f32 to vector<64x128xf32>
    %24 = arith.mulf %23, %22 : vector<64x128xf32>
    %cst_14 = arith.constant 0.000000e+00 : f32
    %25 = vector.broadcast %cst_14 : f32 to vector<64x128xf32>
    %26 = arith.cmpf ogt, %17, %25 : vector<64x128xf32>
    %27 = arith.select %26, %17, %24 : vector<64x128xi1>, vector<64x128xf32>
    %cst_15 = arith.constant 1.05070102 : f32
    %28 = vector.broadcast %cst_15 : f32 to vector<64x128xf32>
    %29 = arith.mulf %28, %27 : vector<64x128xf32>
    %30 = arith.truncf %29 : vector<64x128xf32> to vector<64x128xbf16>
    %c0_16 = arith.constant 0 : index
    %c0_17 = arith.constant 0 : index
    %31 = vector.load %arg4[%c0_16, %c0_17] : memref<128x256xbf16, #tpu.memory_space<vmem>>, vector<128x256xbf16>
    %cst_18 = arith.constant dense<0.000000e+00> : vector<64x256xf32>
    %32 = tpu.matmul %30, %31, %cst_18 {dimension_numbers = #tpu.dot_dimension_numbers<[1], [0], [0], [1], [0, 0, 1, 1], [], []>} : vector<64x128xbf16>, vector<128x256xbf16>, vector<64x256xf32> -> vector<64x256xf32>
    %33 = vector.extract_strided_slice %32 {offsets = [0, 0], sizes = [64, 128], strides = [1, 1]} : vector<64x256xf32> to vector<64x128xf32>
    %34 = math.absf %33 : vector<64x128xf32>
    %cst_19 = arith.constant 0.000000e+00 : f32
    %35 = vector.broadcast %cst_19 : f32 to vector<64x128xf32>
    %36 = arith.subf %35, %34 : vector<64x128xf32>
    %37 = math.exp %36 : vector<64x128xf32>
    %cst_20 = arith.constant 0.000000e+00 : f32
    %38 = vector.broadcast %cst_20 : f32 to vector<64x128xf32>
    %39 = arith.cmpf oge, %33, %38 : vector<64x128xf32>
    %cst_21 = arith.constant 1.000000e+00 : f32
    %40 = vector.broadcast %cst_21 : f32 to vector<64x128xf32>
    %41 = arith.select %39, %40, %37 : vector<64x128xi1>, vector<64x128xf32>
    %cst_22 = arith.constant 1.000000e+00 : f32
    %42 = vector.broadcast %cst_22 : f32 to vector<64x128xf32>
    %43 = arith.addf %42, %37 : vector<64x128xf32>
    %44 = tpu.reciprocal %43 {approx = true} : vector<64x128xf32> -> vector<64x128xf32>
    %45 = arith.mulf %41, %44 : vector<64x128xf32>
    %46 = vector.extract_strided_slice %32 {offsets = [0, 128], sizes = [64, 128], strides = [1, 1]} : vector<64x256xf32> to vector<64x128xf32>
    %47 = arith.mulf %45, %46 : vector<64x128xf32>
    %48 = vector.shape_cast %47 : vector<64x128xf32> to vector<8x8x128xf32>
    %cst_23 = arith.constant dense<0.000000e+00> : vector<8x128xf32>
    %49 = vector.multi_reduction <add>, %48, %cst_23 [1] : vector<8x8x128xf32> to vector<8x128xf32>
    %c0_24 = arith.constant 0 : index
    %c0_25 = arith.constant 0 : index
    %50 = vector.load %arg5[%c0_24, %c0_25] : memref<8x128xf32, #tpu.memory_space<vmem>>, vector<8x128xf32>
    tpu.vector_store %arg5[%c0_24, %c0_25], %49 {strides = array<i32>} : memref<8x128xf32, #tpu.memory_space<vmem>>, vector<8x128xf32>,
    return
  }
  func.func @transform_0(%arg0: i32) -> (i32, i32) {
    %c0_i32 = arith.constant 0 : i32
    %c0_i32_0 = arith.constant 0 : i32
    return %arg0, %c0_i32 : i32, i32
  }
  func.func @transform_1(%arg0: i32) -> (i32, i32) {
    %c0_i32 = arith.constant 0 : i32
    %c0_i32_0 = arith.constant 0 : i32
    %c0_i32_1 = arith.constant 0 : i32
    return %c0_i32, %c0_i32_0 : i32, i32
  }
  func.func @transform_2(%arg0: i32) -> (i32, i32) {
    %c0_i32 = arith.constant 0 : i32
    %c0_i32_0 = arith.constant 0 : i32
    %c0_i32_1 = arith.constant 0 : i32
    return %c0_i32, %c0_i32_0 : i32, i32
  }
  func.func @transform_3(%arg0: i32) -> (i32, i32) {
    %c0_i32 = arith.constant 0 : i32
    %c0_i32_0 = arith.constant 0 : i32
    %c0_i32_1 = arith.constant 0 : i32
    return %c0_i32, %c0_i32_0 : i32, i32
  }
  func.func @transform_4(%arg0: i32) -> (i32, i32) {
    %c0_i32 = arith.constant 0 : i32
    %c0_i32_0 = arith.constant 0 : i32
    return %arg0, %c0_i32 : i32, i32
  }
}

</mosaic_0001>

<llo_original>
// kernel: tpu_custom_call.1
$region0: #{tpu_custom_call.1}
  #allocation0 [shape = 'u32[]', space=smem, size = 0x4, offset = 0x4, fixed_abs, tag = 'smem constant byte address 0x4 - core index']
  #allocation1 [shape = 'u32[144,128]{1,0:T(1,128)}', space=vmem, size = 0x12000, scoped, tag = 'internal scratch']
  %s0 = inlined_call_operand.vmem [shape: bf16[64,32], index: 0, kind: input, shape index: {}]
  %s1 = inlined_call_operand.vmem [shape: bf16[32,128], index: 1, kind: input, shape index: {}]
  %s2 = inlined_call_operand.hbm [shape: bf16[128,128], index: 2, kind: input, shape index: {}]
  %s3 = inlined_call_operand.hbm [shape: bf16[128,256], index: 3, kind: input, shape index: {}]
  %s4 = inlined_call_operand.hbm [shape: f32[8,128], index: 4, kind: output, shape index: {}]
  %s5 = sld [smem:[#allocation0]]
  $region34: #{tpu_custom_call.1} parent=0
    _
  %s7 = ssub.s32 1, %s5
  %s8 = scalar_select 0, %s7, %s5
  $region1: #{tpu_custom_call.1} parent=0
    #allocation2 [shape = 'u8[32768]{0}', space=vmem, size = 0x8000, scoped, tag = 'input window, operand 2, single buffered']
    #allocation3 [shape = 's32[1]{0}', space=sflag, size = 0x4, scoped, tag = 'scoped memory for tpu_custom_call.1']
    #allocation4 [shape = 's32[1]{0}', space=sflag, size = 0x4, scoped, tag = 'scoped memory for tpu_custom_call.1']
    #allocation5 [shape = 'u8[65536]{0}', space=vmem, size = 0x10000, scoped, tag = 'input window, operand 3, single buffered']
    #allocation6 [shape = 's32[1]{0}', space=sflag, size = 0x4, scoped, tag = 'scoped memory for tpu_custom_call.1']
    #allocation7 [shape = 'u8[4096]{0}', space=vmem, size = 0x1000, scoped, tag = 'output window, operand 0, single buffered']
    %9 = vsyncpa [#allocation3], 0
    %10 = vsyncpa [#allocation6], 0
    %11 = vsyncpa [#allocation4], 0
    // Predicated region
    $region2: #{tpu_custom_call.1} parent=1 // pred_check
      _
    $region3: #{tpu_custom_call.1} parent=1 // pred_check_branch
      %13 = sbr.rel (0) target = $region5
    $region4: #{tpu_custom_call.1} parent=1 // pred_region
      _
    $region5: #{tpu_custom_call.1} parent=1 // pred_fallthru
      _
    // Predicated region
    $region6: #{tpu_custom_call.1} parent=1 // pred_check
      _
    $region7: #{tpu_custom_call.1} parent=1 // pred_check_branch
      %15 = sbr.rel (0) target = $region9
    $region8: #{tpu_custom_call.1} parent=1 // pred_region
      _
    $region9: #{tpu_custom_call.1} parent=1 // pred_fallthru
      _
    // Predicated region
    $region10: #{tpu_custom_call.1} parent=1 // pred_check
      _
    $region11: #{tpu_custom_call.1} parent=1 // pred_check_branch
      %17 = sbr.rel (0) target = $region13
    $region12: #{tpu_custom_call.1} parent=1 // pred_region
      %s19 = ssub.s32 1024, 1024
      %20 = vsyncadd [#allocation3], %s19
      %s21 = sshll.u32 [#allocation2], 4
      %s22 = int_to_ptr.vmem [resolvable:$true] %s21
      %27 = dma.hbm_to_vmem [thread:$0]  %s2, 1024, %s22, [#allocation3], 64, 64, 4
    $region13: #{tpu_custom_call.1} parent=1 // pred_fallthru
      _
    // Predicated region
    $region14: #{tpu_custom_call.1} parent=1 // pred_check
      _
    $region15: #{tpu_custom_call.1} parent=1 // pred_check_branch
      %29 = sbr.rel (0) target = $region17
    $region16: #{tpu_custom_call.1} parent=1 // pred_region
      %s31 = ssub.s32 2048, 2048
      %32 = vsyncadd [#allocation6], %s31
      %s33 = sshll.u32 [#allocation5], 4
      %s34 = int_to_ptr.vmem [resolvable:$true] %s33
      %39 = dma.hbm_to_vmem [thread:$0]  %s3, 2048, %s34, [#allocation6], 128, 128, 8
    $region17: #{tpu_custom_call.1} parent=1 // pred_fallthru
      _
    // Predicated region
    $region18: #{tpu_custom_call.1} parent=1 // pred_check
      _
    $region19: #{tpu_custom_call.1} parent=1 // pred_check_branch
      %41 = sbr.rel (0) target = $region21
    $region20: #{tpu_custom_call.1} parent=1 // pred_region
      %42 = dma.done [#allocation3], 1024
    $region21: #{tpu_custom_call.1} parent=1 // pred_fallthru
      _
    // Predicated region
    $region22: #{tpu_custom_call.1} parent=1 // pred_check
      _
    $region23: #{tpu_custom_call.1} parent=1 // pred_check_branch
      %44 = sbr.rel (0) target = $region25
    $region24: #{tpu_custom_call.1} parent=1 // pred_region
      %45 = dma.done [#allocation6], 2048
    $region25: #{tpu_custom_call.1} parent=1 // pred_fallthru
      _
    %v47 = vld [vmem:[%s0] sm:$0xf]
    %v48 = vld [vmem:[%s0 + $0x4] sm:$0xf]
    %v49 = vld [vmem:[%s0 + $0x8] sm:$0xf]
    %v50 = vld [vmem:[%s0 + $0xc] sm:$0xf]
    %v51 = vld [vmem:[%s0 + $0x10] sm:$0xf]
    %v52 = vld [vmem:[%s0 + $0x14] sm:$0xf]
    %v53 = vld [vmem:[%s0 + $0x18] sm:$0xf]
    %v54 = vld [vmem:[%s0 + $0x1c] sm:$0xf]
    %v55 = vld [vmem:[%s1] sm:$0xf]
    %v56 = vld [vmem:[%s1 + $0x4] sm:$0xf]
    %v57 = vld [vmem:[%s1 + $0x8] sm:$0xf]
    %v58 = vld [vmem:[%s1 + $0xc] sm:$0xf]
    %v67 = vunpack.c.l.b16 %v47
    %v68 = vunpack.c.l.b16 %v48
    %v69 = vunpack.c.l.b16 %v49
    %v70 = vunpack.c.l.b16 %v50
    %v71 = vunpack.c.l.b16 %v51
    %v72 = vunpack.c.l.b16 %v52
    %v73 = vunpack.c.l.b16 %v53
    %v74 = vunpack.c.l.b16 %v54
    %v75 = vpack.c.b16 %v68, %v67
    %v76 = vpack.c.b16 %v70, %v69
    %v77 = vpack.c.b16 %v72, %v71
    %v78 = vpack.c.b16 %v74, %v73
    %v83 = vunpack.c.l.b16 %v55
    %v84 = vunpack.c.l.b16 %v56
    %v85 = vunpack.c.l.b16 %v57
    %v86 = vunpack.c.l.b16 %v58
    %v87 = vpack.c.b16 %v84, %v83
    %v88 = vpack.c.b16 %v86, %v85
    %vm91 = vcmask 261120
    %v93 = vsel %vm91, %v75, 0
    %v96 = vsel %vm91, %v76, 0
    %v99 = vsel %vm91, %v77, 0
    %v102 = vsel %vm91, %v78, 0
    %104 = vmatprep.subr.bf16.mxu0 0
    %105 = vmatpush1.bf16.msra.mxu0 0
    %106 = vmatprep.subr.bf16.mxu0 0
    %107 = vmatpush1.bf16.msra.mxu0 0
    %108 = vmatprep.subr.bf16.mxu0 0
    %109 = vmatpush1.bf16.msra.mxu0 0
    %110 = vmatprep.subr.bf16.mxu0 0
    %111 = vmatpush1.bf16.msra.mxu0 0
    %112 = vmatprep.subr.bf16.mxu0 0
    %113 = vmatpush1.bf16.msra.mxu0 0
    %114 = vmatprep.subr.bf16.mxu0 0
    %115 = vmatpush1.bf16.msra.mxu0 0
    %116 = vmatprep.subr.bf16.mxu0 0
    %117 = vmatpush1.bf16.msra.mxu0 %v88
    %118 = vmatprep.subr.bf16.mxu0 0
    %119 = vmatpush1.bf16.msra.mxu0 %v87
    %120 = vmatprep.subr.bf16.mxu0 0
    %121 = vmatpush2.bf16.msra.mxu0 0
    %122 = vmatprep.subr.bf16.mxu0 0
    %123 = vmatpush2.bf16.msra.mxu0 0
    %124 = vmatprep.subr.bf16.mxu0 0
    %125 = vmatpush2.bf16.msra.mxu0 0
    %126 = vmatprep.subr.bf16.mxu0 0
    %127 = vmatpush2.bf16.msra.mxu0 0
    %128 = vmatprep.subr.bf16.mxu0 0
    %129 = vmatpush2.bf16.msra.mxu0 0
    %130 = vmatprep.subr.bf16.mxu0 0
    %131 = vmatpush2.bf16.msra.mxu0 0
    %132 = vmatprep.subr.bf16.mxu0 0
    %133 = vmatpush2.bf16.msra.mxu0 0
    %134 = vmatprep.subr.bf16.mxu0 0
    %135 = vmatpush2.bf16.msra.mxu0 0
    %136 = vmatprep.mubr.bf16.mxu0 0
    %137 = vmatmul.mubr.bf16.gmra.mxu0 %v93
    %v138 = vpop.f32.mrf.mxu0
    %v139 = vadd.f32 0.0, %v138
    %v140 = vpop.f32.mrf.mxu0
    %v141 = vpop.f32.mrf.mxu0
    %v142 = vadd.f32 0.0, %v141
    %v143 = vpop.f32.mrf.mxu0
    %144 = vmatprep.mubr.bf16.mxu0 0
    %145 = vmatmul.mubr.bf16.gmra.mxu0 %v96
    %v146 = vpop.f32.mrf.mxu0
    %v147 = vadd.f32 0.0, %v146
    %v148 = vpop.f32.mrf.mxu0
    %v149 = vpop.f32.mrf.mxu0
    %v150 = vadd.f32 0.0, %v149
    %v151 = vpop.f32.mrf.mxu0
    %152 = vmatprep.mubr.bf16.mxu0 0
    %153 = vmatmul.mubr.bf16.gmra.mxu0 %v99
    %v154 = vpop.f32.mrf.mxu0
    %v155 = vadd.f32 0.0, %v154
    %v156 = vpop.f32.mrf.mxu0
    %v157 = vpop.f32.mrf.mxu0
    %v158 = vadd.f32 0.0, %v157
    %v159 = vpop.f32.mrf.mxu0
    %160 = vmatprep.mubr.bf16.mxu0 0
    %161 = vmatmul.mubr.bf16.gmra.mxu0 %v102
    %v162 = vpop.f32.mrf.mxu0
    %v163 = vadd.f32 0.0, %v162
    %v164 = vpop.f32.mrf.mxu0
    %v165 = vpop.f32.mrf.mxu0
    %v166 = vadd.f32 0.0, %v165
    %v167 = vpop.f32.mrf.mxu0
    %168 = vdwg.mxu0
    %v169 = vmin.f32 %v139, 0.0
    %v170 = vmin.f32 %v142, 0.0
    %v171 = vmin.f32 %v147, 0.0
    %v172 = vmin.f32 %v150, 0.0
    %v173 = vmin.f32 %v155, 0.0
    %v174 = vmin.f32 %v158, 0.0
    %v175 = vmin.f32 %v163, 0.0
    %v176 = vmin.f32 %v166, 0.0
    %v177 = vmul.f32 %v169, 1.442695
    %v178 = vpow.pop %v177
    %v179 = vmul.f32 %v170, 1.442695
    %v180 = vpow.pop %v179
    %v181 = vmul.f32 %v171, 1.442695
    %v182 = vpow.pop %v181
    %v183 = vmul.f32 %v172, 1.442695
    %v184 = vpow.pop %v183
    %v185 = vmul.f32 %v173, 1.442695
    %v186 = vpow.pop %v185
    %v187 = vmul.f32 %v174, 1.442695
    %v188 = vpow.pop %v187
    %v189 = vmul.f32 %v175, 1.442695
    %v190 = vpow.pop %v189
    %v191 = vmul.f32 %v176, 1.442695
    %v192 = vpow.pop %v191
    %v193 = vsub.f32 %v178, 1.0
    %v194 = vsub.f32 %v180, 1.0
    %v195 = vsub.f32 %v182, 1.0
    %v196 = vsub.f32 %v184, 1.0
    %v197 = vsub.f32 %v186, 1.0
    %v198 = vsub.f32 %v188, 1.0
    %v199 = vsub.f32 %v190, 1.0
    %v200 = vsub.f32 %v192, 1.0
    %v201 = vmul.f32 %v193, 1.6732632
    %v202 = vmul.f32 %v194, 1.6732632
    %v203 = vmul.f32 %v195, 1.6732632
    %v204 = vmul.f32 %v196, 1.6732632
    %v205 = vmul.f32 %v197, 1.6732632
    %v206 = vmul.f32 %v198, 1.6732632
    %v207 = vmul.f32 %v199, 1.6732632
    %v208 = vmul.f32 %v200, 1.6732632
    %vm209 = vcmp.gt.f32.partialorder %v139, 0.0
    %vm210 = vcmp.gt.f32.partialorder %v142, 0.0
    %vm211 = vcmp.gt.f32.partialorder %v147, 0.0
    %vm212 = vcmp.gt.f32.partialorder %v150, 0.0
    %vm213 = vcmp.gt.f32.partialorder %v155, 0.0
    %vm214 = vcmp.gt.f32.partialorder %v158, 0.0
    %vm215 = vcmp.gt.f32.partialorder %v163, 0.0
    %vm216 = vcmp.gt.f32.partialorder %v166, 0.0
    %v217 = vsel %vm209, %v139, %v201
    %v218 = vsel %vm210, %v142, %v202
    %v219 = vsel %vm211, %v147, %v203
    %v220 = vsel %vm212, %v150, %v204
    %v221 = vsel %vm213, %v155, %v205
    %v222 = vsel %vm214, %v158, %v206
    %v223 = vsel %vm215, %v163, %v207
    %v224 = vsel %vm216, %v166, %v208
    %v225 = vmul.f32 %v217, 1.050701
    %v226 = vmul.f32 %v218, 1.050701
    %v227 = vmul.f32 %v219, 1.050701
    %v228 = vmul.f32 %v220, 1.050701
    %v229 = vmul.f32 %v221, 1.050701
    %v230 = vmul.f32 %v222, 1.050701
    %v231 = vmul.f32 %v223, 1.050701
    %v232 = vmul.f32 %v224, 1.050701
    %v233 = vpack.c.bf16 %v226, %v225
    %v234 = vpack.c.bf16 %v228, %v227
    %v235 = vpack.c.bf16 %v230, %v229
    %v236 = vpack.c.bf16 %v232, %v231
    %v237 = vld [vmem:[#allocation2] sm:$0xf]
    %v238 = vld [vmem:[#allocation2 + $0x4] sm:$0xf]
    %v239 = vld [vmem:[#allocation2 + $0x8] sm:$0xf]
    %v240 = vld [vmem:[#allocation2 + $0xc] sm:$0xf]
    %v241 = vld [vmem:[#allocation2 + $0x10] sm:$0xf]
    %v242 = vld [vmem:[#allocation2 + $0x14] sm:$0xf]
    %v243 = vld [vmem:[#allocation2 + $0x18] sm:$0xf]
    %v244 = vld [vmem:[#allocation2 + $0x1c] sm:$0xf]
    %v245 = vld [vmem:[#allocation2 + $0x20] sm:$0xf]
    %v246 = vld [vmem:[#allocation2 + $0x24] sm:$0xf]
    %v247 = vld [vmem:[#allocation2 + $0x28] sm:$0xf]
    %v248 = vld [vmem:[#allocation2 + $0x2c] sm:$0xf]
    %v249 = vld [vmem:[#allocation2 + $0x30] sm:$0xf]
    %v250 = vld [vmem:[#allocation2 + $0x34] sm:$0xf]
    %v251 = vld [vmem:[#allocation2 + $0x38] sm:$0xf]
    %v252 = vld [vmem:[#allocation2 + $0x3c] sm:$0xf]
    %v269 = vunpack.c.l.b16 %v237
    %v270 = vunpack.c.l.b16 %v238
    %v271 = vunpack.c.l.b16 %v239
    %v272 = vunpack.c.l.b16 %v240
    %v273 = vunpack.c.l.b16 %v241
    %v274 = vunpack.c.l.b16 %v242
    %v275 = vunpack.c.l.b16 %v243
    %v276 = vunpack.c.l.b16 %v244
    %v277 = vunpack.c.l.b16 %v245
    %v278 = vunpack.c.l.b16 %v246
    %v279 = vunpack.c.l.b16 %v247
    %v280 = vunpack.c.l.b16 %v248
    %v281 = vunpack.c.l.b16 %v249
    %v282 = vunpack.c.l.b16 %v250
    %v283 = vunpack.c.l.b16 %v251
    %v284 = vunpack.c.l.b16 %v252
    %v285 = vpack.c.b16 %v270, %v269
    %v286 = vpack.c.b16 %v272, %v271
    %v287 = vpack.c.b16 %v274, %v273
    %v288 = vpack.c.b16 %v276, %v275
    %v289 = vpack.c.b16 %v278, %v277
    %v290 = vpack.c.b16 %v280, %v279
    %v291 = vpack.c.b16 %v282, %v281
    %v292 = vpack.c.b16 %v284, %v283
    %301 = vmatprep.subr.bf16.mxu0 0
    %302 = vmatpush1.bf16.msra.mxu0 %v292
    %303 = vmatprep.subr.bf16.mxu0 0
    %304 = vmatpush1.bf16.msra.mxu0 %v291
    %305 = vmatprep.subr.bf16.mxu0 0
    %306 = vmatpush1.bf16.msra.mxu0 %v290
    %307 = vmatprep.subr.bf16.mxu0 0
    %308 = vmatpush1.bf16.msra.mxu0 %v289
    %309 = vmatprep.subr.bf16.mxu0 0
    %310 = vmatpush1.bf16.msra.mxu0 %v288
    %311 = vmatprep.subr.bf16.mxu0 0
    %312 = vmatpush1.bf16.msra.mxu0 %v287
    %313 = vmatprep.subr.bf16.mxu0 0
    %314 = vmatpush1.bf16.msra.mxu0 %v286
    %315 = vmatprep.subr.bf16.mxu0 0
    %316 = vmatpush1.bf16.msra.mxu0 %v285
    %317 = vmatprep.subr.bf16.mxu0 0
    %318 = vmatpush2.bf16.msra.mxu0 0
    %319 = vmatprep.subr.bf16.mxu0 0
    %320 = vmatpush2.bf16.msra.mxu0 0
    %321 = vmatprep.subr.bf16.mxu0 0
    %322 = vmatpush2.bf16.msra.mxu0 0
    %323 = vmatprep.subr.bf16.mxu0 0
    %324 = vmatpush2.bf16.msra.mxu0 0
    %325 = vmatprep.subr.bf16.mxu0 0
    %326 = vmatpush2.bf16.msra.mxu0 0
    %327 = vmatprep.subr.bf16.mxu0 0
    %328 = vmatpush2.bf16.msra.mxu0 0
    %329 = vmatprep.subr.bf16.mxu0 0
    %330 = vmatpush2.bf16.msra.mxu0 0
    %331 = vmatprep.subr.bf16.mxu0 0
    %332 = vmatpush2.bf16.msra.mxu0 0
    %333 = vmatprep.mubr.bf16.mxu0 0
    %334 = vmatmul.mubr.bf16.gmra.mxu0 %v233
    %v335 = vpop.f32.mrf.mxu0
    %v336 = vadd.f32 0.0, %v335
    %v337 = vpop.f32.mrf.mxu0
    %v338 = vpop.f32.mrf.mxu0
    %v339 = vadd.f32 0.0, %v338
    %v340 = vpop.f32.mrf.mxu0
    %341 = vmatprep.mubr.bf16.mxu0 0
    %342 = vmatmul.mubr.bf16.gmra.mxu0 %v234
    %v343 = vpop.f32.mrf.mxu0
    %v344 = vadd.f32 0.0, %v343
    %v345 = vpop.f32.mrf.mxu0
    %v346 = vpop.f32.mrf.mxu0
    %v347 = vadd.f32 0.0, %v346
    %v348 = vpop.f32.mrf.mxu0
    %349 = vmatprep.mubr.bf16.mxu0 0
    %350 = vmatmul.mubr.bf16.gmra.mxu0 %v235
    %v351 = vpop.f32.mrf.mxu0
    %v352 = vadd.f32 0.0, %v351
    %v353 = vpop.f32.mrf.mxu0
    %v354 = vpop.f32.mrf.mxu0
    %v355 = vadd.f32 0.0, %v354
    %v356 = vpop.f32.mrf.mxu0
    %357 = vmatprep.mubr.bf16.mxu0 0
    %358 = vmatmul.mubr.bf16.gmra.mxu0 %v236
    %v359 = vpop.f32.mrf.mxu0
    %v360 = vadd.f32 0.0, %v359
    %v361 = vpop.f32.mrf.mxu0
    %v362 = vpop.f32.mrf.mxu0
    %v363 = vadd.f32 0.0, %v362
    %v364 = vpop.f32.mrf.mxu0
    %365 = vdwg.mxu0
    %v366 = vmin.f32 %v336, 0.0
    %v367 = vmin.f32 %v339, 0.0
    %v368 = vmin.f32 %v344, 0.0
    %v369 = vmin.f32 %v347, 0.0
    %v370 = vmin.f32 %v352, 0.0
    %v371 = vmin.f32 %v355, 0.0
    %v372 = vmin.f32 %v360, 0.0
    %v373 = vmin.f32 %v363, 0.0
    %v374 = vmul.f32 %v366, 1.442695
    %v375 = vpow.pop %v374
    %v376 = vmul.f32 %v367, 1.442695
    %v377 = vpow.pop %v376
    %v378 = vmul.f32 %v368, 1.442695
    %v379 = vpow.pop %v378
    %v380 = vmul.f32 %v369, 1.442695
    %v381 = vpow.pop %v380
    %v382 = vmul.f32 %v370, 1.442695
    %v383 = vpow.pop %v382
    %v384 = vmul.f32 %v371, 1.442695
    %v385 = vpow.pop %v384
    %v386 = vmul.f32 %v372, 1.442695
    %v387 = vpow.pop %v386
    %v388 = vmul.f32 %v373, 1.442695
    %v389 = vpow.pop %v388
    %v390 = vsub.f32 %v375, 1.0
    %v391 = vsub.f32 %v377, 1.0
    %v392 = vsub.f32 %v379, 1.0
    %v393 = vsub.f32 %v381, 1.0
    %v394 = vsub.f32 %v383, 1.0
    %v395 = vsub.f32 %v385, 1.0
    %v396 = vsub.f32 %v387, 1.0
    %v397 = vsub.f32 %v389, 1.0
    %v398 = vmul.f32 %v390, 1.6732632
    %v399 = vmul.f32 %v391, 1.6732632
    %v400 = vmul.f32 %v392, 1.6732632
    %v401 = vmul.f32 %v393, 1.6732632
    %v402 = vmul.f32 %v394, 1.6732632
    %v403 = vmul.f32 %v395, 1.6732632
    %v404 = vmul.f32 %v396, 1.6732632
    %v405 = vmul.f32 %v397, 1.6732632
    %vm406 = vcmp.gt.f32.partialorder %v336, 0.0
    %vm407 = vcmp.gt.f32.partialorder %v339, 0.0
    %vm408 = vcmp.gt.f32.partialorder %v344, 0.0
    %vm409 = vcmp.gt.f32.partialorder %v347, 0.0
    %vm410 = vcmp.gt.f32.partialorder %v352, 0.0
    %vm411 = vcmp.gt.f32.partialorder %v355, 0.0
    %vm412 = vcmp.gt.f32.partialorder %v360, 0.0
    %vm413 = vcmp.gt.f32.partialorder %v363, 0.0
    %v414 = vsel %vm406, %v336, %v398
    %v415 = vsel %vm407, %v339, %v399
    %v416 = vsel %vm408, %v344, %v400
    %v417 = vsel %vm409, %v347, %v401
    %v418 = vsel %vm410, %v352, %v402
    %v419 = vsel %vm411, %v355, %v403
    %v420 = vsel %vm412, %v360, %v404
    %v421 = vsel %vm413, %v363, %v405
    %v422 = vmul.f32 %v414, 1.050701
    %v423 = vmul.f32 %v415, 1.050701
    %v424 = vmul.f32 %v416, 1.050701
    %v425 = vmul.f32 %v417, 1.050701
    %v426 = vmul.f32 %v418, 1.050701
    %v427 = vmul.f32 %v419, 1.050701
    %v428 = vmul.f32 %v420, 1.050701
    %v429 = vmul.f32 %v421, 1.050701
    %v430 = vpack.c.bf16 %v423, %v422
    %v431 = vpack.c.bf16 %v425, %v424
    %v432 = vpack.c.bf16 %v427, %v426
    %v433 = vpack.c.bf16 %v429, %v428
    %v434 = vld [vmem:[#allocation5] sm:$0xff]
    %v435 = vld [vmem:[#allocation5 + $0x8] sm:$0xff]
    %v436 = vld [vmem:[#allocation5 + $0x10] sm:$0xff]
    %v437 = vld [vmem:[#allocation5 + $0x18] sm:$0xff]
    %v438 = vld [vmem:[#allocation5 + $0x20] sm:$0xff]
    %v439 = vld [vmem:[#allocation5 + $0x28] sm:$0xff]
    %v440 = vld [vmem:[#allocation5 + $0x30] sm:$0xff]
    %v441 = vld [vmem:[#allocation5 + $0x38] sm:$0xff]
    %v442 = vld [vmem:[#allocation5 + $0x40] sm:$0xff]
    %v443 = vld [vmem:[#allocation5 + $0x48] sm:$0xff]
    %v444 = vld [vmem:[#allocation5 + $0x50] sm:$0xff]
    %v445 = vld [vmem:[#allocation5 + $0x58] sm:$0xff]
    %v446 = vld [vmem:[#allocation5 + $0x60] sm:$0xff]
    %v447 = vld [vmem:[#allocation5 + $0x68] sm:$0xff]
    %v448 = vld [vmem:[#allocation5 + $0x70] sm:$0xff]
    %v449 = vld [vmem:[#allocation5 + $0x78] sm:$0xff]
    %v466 = vunpack.c.l.b16 %v434
    %v467 = vunpack.c.h.b16 %v434
    %v468 = vunpack.c.l.b16 %v435
    %v469 = vunpack.c.h.b16 %v435
    %v470 = vunpack.c.l.b16 %v436
    %v471 = vunpack.c.h.b16 %v436
    %v472 = vunpack.c.l.b16 %v437
    %v473 = vunpack.c.h.b16 %v437
    %v474 = vunpack.c.l.b16 %v438
    %v475 = vunpack.c.h.b16 %v438
    %v476 = vunpack.c.l.b16 %v439
    %v477 = vunpack.c.h.b16 %v439
    %v478 = vunpack.c.l.b16 %v440
    %v479 = vunpack.c.h.b16 %v440
    %v480 = vunpack.c.l.b16 %v441
    %v481 = vunpack.c.h.b16 %v441
    %v482 = vunpack.c.l.b16 %v442
    %v483 = vunpack.c.h.b16 %v442
    %v484 = vunpack.c.l.b16 %v443
    %v485 = vunpack.c.h.b16 %v443
    %v486 = vunpack.c.l.b16 %v444
    %v487 = vunpack.c.h.b16 %v444
    %v488 = vunpack.c.l.b16 %v445
    %v489 = vunpack.c.h.b16 %v445
    %v490 = vunpack.c.l.b16 %v446
    %v491 = vunpack.c.h.b16 %v446
    %v492 = vunpack.c.l.b16 %v447
    %v493 = vunpack.c.h.b16 %v447
    %v494 = vunpack.c.l.b16 %v448
    %v495 = vunpack.c.h.b16 %v448
    %v496 = vunpack.c.l.b16 %v449
    %v497 = vunpack.c.h.b16 %v449
    %v498 = vpack.c.b16 %v468, %v466
    %v499 = vpack.c.b16 %v469, %v467
    %v500 = vpack.c.b16 %v472, %v470
    %v501 = vpack.c.b16 %v473, %v471
    %v502 = vpack.c.b16 %v476, %v474
    %v503 = vpack.c.b16 %v477, %v475
    %v504 = vpack.c.b16 %v480, %v478
    %v505 = vpack.c.b16 %v481, %v479
    %v506 = vpack.c.b16 %v484, %v482
    %v507 = vpack.c.b16 %v485, %v483
    %v508 = vpack.c.b16 %v488, %v486
    %v509 = vpack.c.b16 %v489, %v487
    %v510 = vpack.c.b16 %v492, %v490
    %v511 = vpack.c.b16 %v493, %v491
    %v512 = vpack.c.b16 %v496, %v494
    %v513 = vpack.c.b16 %v497, %v495
    %530 = vmatprep.subr.bf16.mxu0 %v513
    %531 = vmatpush1.bf16.msra.mxu0 %v512
    %532 = vmatprep.subr.bf16.mxu0 %v511
    %533 = vmatpush1.bf16.msra.mxu0 %v510
    %534 = vmatprep.subr.bf16.mxu0 %v509
    %535 = vmatpush1.bf16.msra.mxu0 %v508
    %536 = vmatprep.subr.bf16.mxu0 %v507
    %537 = vmatpush1.bf16.msra.mxu0 %v506
    %538 = vmatprep.subr.bf16.mxu0 %v505
    %539 = vmatpush1.bf16.msra.mxu0 %v504
    %540 = vmatprep.subr.bf16.mxu0 %v503
    %541 = vmatpush1.bf16.msra.mxu0 %v502
    %542 = vmatprep.subr.bf16.mxu0 %v501
    %543 = vmatpush1.bf16.msra.mxu0 %v500
    %544 = vmatprep.subr.bf16.mxu0 %v499
    %545 = vmatpush1.bf16.msra.mxu0 %v498
    %546 = vmatprep.subr.bf16.mxu0 0
    %547 = vmatpush2.bf16.msra.mxu0 0
    %548 = vmatprep.subr.bf16.mxu0 0
    %549 = vmatpush2.bf16.msra.mxu0 0
    %550 = vmatprep.subr.bf16.mxu0 0
    %551 = vmatpush2.bf16.msra.mxu0 0
    %552 = vmatprep.subr.bf16.mxu0 0
    %553 = vmatpush2.bf16.msra.mxu0 0
    %554 = vmatprep.subr.bf16.mxu0 0
    %555 = vmatpush2.bf16.msra.mxu0 0
    %556 = vmatprep.subr.bf16.mxu0 0
    %557 = vmatpush2.bf16.msra.mxu0 0
    %558 = vmatprep.subr.bf16.mxu0 0
    %559 = vmatpush2.bf16.msra.mxu0 0
    %560 = vmatprep.subr.bf16.mxu0 0
    %561 = vmatpush2.bf16.msra.mxu0 0
    %562 = vmatprep.mubr.bf16.mxu0 0
    %563 = vmatmul.mubr.bf16.gmra.mxu0 %v430
    %v564 = vpop.f32.mrf.mxu0
    %v565 = vadd.f32 0.0, %v564
    %v566 = vpop.f32.mrf.mxu0
    %v567 = vadd.f32 0.0, %v566
    %v568 = vpop.f32.mrf.mxu0
    %v569 = vadd.f32 0.0, %v568
    %v570 = vpop.f32.mrf.mxu0
    %v571 = vadd.f32 0.0, %v570
    %572 = vmatprep.mubr.bf16.mxu0 0
    %573 = vmatmul.mubr.bf16.gmra.mxu0 %v431
    %v574 = vpop.f32.mrf.mxu0
    %v575 = vadd.f32 0.0, %v574
    %v576 = vpop.f32.mrf.mxu0
    %v577 = vadd.f32 0.0, %v576
    %v578 = vpop.f32.mrf.mxu0
    %v579 = vadd.f32 0.0, %v578
    %v580 = vpop.f32.mrf.mxu0
    %v581 = vadd.f32 0.0, %v580
    %582 = vmatprep.mubr.bf16.mxu0 0
    %583 = vmatmul.mubr.bf16.gmra.mxu0 %v432
    %v584 = vpop.f32.mrf.mxu0
    %v585 = vadd.f32 0.0, %v584
    %v586 = vpop.f32.mrf.mxu0
    %v587 = vadd.f32 0.0, %v586
    %v588 = vpop.f32.mrf.mxu0
    %v589 = vadd.f32 0.0, %v588
    %v590 = vpop.f32.mrf.mxu0
    %v591 = vadd.f32 0.0, %v590
    %592 = vmatprep.mubr.bf16.mxu0 0
    %593 = vmatmul.mubr.bf16.gmra.mxu0 %v433
    %v594 = vpop.f32.mrf.mxu0
    %v595 = vadd.f32 0.0, %v594
    %v596 = vpop.f32.mrf.mxu0
    %v597 = vadd.f32 0.0, %v596
    %v598 = vpop.f32.mrf.mxu0
    %v599 = vadd.f32 0.0, %v598
    %v600 = vpop.f32.mrf.mxu0
    %v601 = vadd.f32 0.0, %v600
    %602 = vdwg.mxu0
    %v603 = vand.u32 2147483647, %v565
    %v604 = vand.u32 2147483647, %v569
    %v605 = vand.u32 2147483647, %v575
    %v606 = vand.u32 2147483647, %v579
    %v607 = vand.u32 2147483647, %v585
    %v608 = vand.u32 2147483647, %v589
    %v609 = vand.u32 2147483647, %v595
    %v610 = vand.u32 2147483647, %v599
    %v611 = vsub.f32 0.0, %v603
    %v612 = vsub.f32 0.0, %v604
    %v613 = vsub.f32 0.0, %v605
    %v614 = vsub.f32 0.0, %v606
    %v615 = vsub.f32 0.0, %v607
    %v616 = vsub.f32 0.0, %v608
    %v617 = vsub.f32 0.0, %v609
    %v618 = vsub.f32 0.0, %v610
    %v619 = vmul.f32 %v611, 1.442695
    %v620 = vpow.pop %v619
    %v621 = vmul.f32 %v612, 1.442695
    %v622 = vpow.pop %v621
    %v623 = vmul.f32 %v613, 1.442695
    %v624 = vpow.pop %v623
    %v625 = vmul.f32 %v614, 1.442695
    %v626 = vpow.pop %v625
    %v627 = vmul.f32 %v615, 1.442695
    %v628 = vpow.pop %v627
    %v629 = vmul.f32 %v616, 1.442695
    %v630 = vpow.pop %v629
    %v631 = vmul.f32 %v617, 1.442695
    %v632 = vpow.pop %v631
    %v633 = vmul.f32 %v618, 1.442695
    %v634 = vpow.pop %v633
    %vm635 = vcmp.ge.f32.partialorder %v565, 0.0
    %vm636 = vcmp.ge.f32.partialorder %v569, 0.0
    %vm637 = vcmp.ge.f32.partialorder %v575, 0.0
    %vm638 = vcmp.ge.f32.partialorder %v579, 0.0
    %vm639 = vcmp.ge.f32.partialorder %v585, 0.0
    %vm640 = vcmp.ge.f32.partialorder %v589, 0.0
    %vm641 = vcmp.ge.f32.partialorder %v595, 0.0
    %vm642 = vcmp.ge.f32.partialorder %v599, 0.0
    %v643 = vsel %vm635, 1.0, %v620
    %v644 = vsel %vm636, 1.0, %v622
    %v645 = vsel %vm637, 1.0, %v624
    %v646 = vsel %vm638, 1.0, %v626
    %v647 = vsel %vm639, 1.0, %v628
    %v648 = vsel %vm640, 1.0, %v630
    %v649 = vsel %vm641, 1.0, %v632
    %v650 = vsel %vm642, 1.0, %v634
    %v651 = vadd.f32 %v620, 1.0
    %v652 = vadd.f32 %v622, 1.0
    %v653 = vadd.f32 %v624, 1.0
    %v654 = vadd.f32 %v626, 1.0
    %v655 = vadd.f32 %v628, 1.0
    %v656 = vadd.f32 %v630, 1.0
    %v657 = vadd.f32 %v632, 1.0
    %v658 = vadd.f32 %v634, 1.0
    %v659 = vrcp.pop %v651
    %v660 = vrcp.pop %v652
    %v661 = vrcp.pop %v653
    %v662 = vrcp.pop %v654
    %v663 = vrcp.pop %v655
    %v664 = vrcp.pop %v656
    %v665 = vrcp.pop %v657
    %v666 = vrcp.pop %v658
    %v667 = vmul.f32 %v643, %v659
    %v668 = vmul.f32 %v644, %v660
    %v669 = vmul.f32 %v645, %v661
    %v670 = vmul.f32 %v646, %v662
    %v671 = vmul.f32 %v647, %v663
    %v672 = vmul.f32 %v648, %v664
    %v673 = vmul.f32 %v649, %v665
    %v674 = vmul.f32 %v650, %v666
    %v675 = vmul.f32 %v667, %v567
    %v676 = vmul.f32 %v668, %v571
    %v677 = vmul.f32 %v669, %v577
    %v678 = vmul.f32 %v670, %v581
    %v679 = vmul.f32 %v671, %v587
    %v680 = vmul.f32 %v672, %v591
    %v681 = vmul.f32 %v673, %v597
    %v682 = vmul.f32 %v674, %v601
    %v683 = vrot.slane %v675, 4
    %v684 = vadd.f32 %v675, %v683
    %v685 = vrot.slane %v684, 2
    %v686 = vadd.f32 %v684, %v685
    %v687 = vrot.slane %v686, 1
    %v688 = vadd.f32 %v686, %v687
    %v689 = vrot.slane %v676, 4
    %v690 = vadd.f32 %v676, %v689
    %v691 = vrot.slane %v690, 2
    %v692 = vadd.f32 %v690, %v691
    %v693 = vrot.slane %v692, 1
    %v694 = vadd.f32 %v692, %v693
    %v695 = vrot.slane %v677, 4
    %v696 = vadd.f32 %v677, %v695
    %v697 = vrot.slane %v696, 2
    %v698 = vadd.f32 %v696, %v697
    %v699 = vrot.slane %v698, 1
    %v700 = vadd.f32 %v698, %v699
    %v701 = vrot.slane %v678, 4
    %v702 = vadd.f32 %v678, %v701
    %v703 = vrot.slane %v702, 2
    %v704 = vadd.f32 %v702, %v703
    %v705 = vrot.slane %v704, 1
    %v706 = vadd.f32 %v704, %v705
    %v707 = vrot.slane %v679, 4
    %v708 = vadd.f32 %v679, %v707
    %v709 = vrot.slane %v708, 2
    %v710 = vadd.f32 %v708, %v709
    %v711 = vrot.slane %v710, 1
    %v712 = vadd.f32 %v710, %v711
    %v713 = vrot.slane %v680, 4
    %v714 = vadd.f32 %v680, %v713
    %v715 = vrot.slane %v714, 2
    %v716 = vadd.f32 %v714, %v715
    %v717 = vrot.slane %v716, 1
    %v718 = vadd.f32 %v716, %v717
    %v719 = vrot.slane %v681, 4
    %v720 = vadd.f32 %v681, %v719
    %v721 = vrot.slane %v720, 2
    %v722 = vadd.f32 %v720, %v721
    %v723 = vrot.slane %v722, 1
    %v724 = vadd.f32 %v722, %v723
    %v725 = vrot.slane %v682, 4
    %v726 = vadd.f32 %v682, %v725
    %v727 = vrot.slane %v726, 2
    %v728 = vadd.f32 %v726, %v727
    %v729 = vrot.slane %v728, 1
    %v730 = vadd.f32 %v728, %v729
    %vm739 = vcmask 1041409
    %v740 = vsel %vm739, %v694, %v688
    %vm741 = vcmask 1042434
    %v742 = vsel %vm741, %v700, %v740
    %vm743 = vcmask 1043459
    %v744 = vsel %vm743, %v706, %v742
    %vm745 = vcmask 1044484
    %v746 = vsel %vm745, %v712, %v744
    %vm747 = vcmask 1045509
    %v748 = vsel %vm747, %v718, %v746
    %vm749 = vcmask 1046534
    %v750 = vsel %vm749, %v724, %v748
    %vm751 = vcmask 1047559
    %v752 = vsel %vm751, %v730, %v750
    %754 = vst [vmem:[#allocation7] sm:$0xff] %v752
    // Predicated region
    $region26: #{tpu_custom_call.1} parent=1 // pred_check
      _
    $region27: #{tpu_custom_call.1} parent=1 // pred_check_branch
      %756 = sbr.rel (0) target = $region29
    $region28: #{tpu_custom_call.1} parent=1 // pred_region
      %s758 = ssub.s32 128, 128
      %759 = vsyncadd [#allocation4], %s758
      %s761 = sshll.u32 [#allocation7], 4
      %s762 = int_to_ptr.vmem [resolvable:$true] %s761
      %764 = dma.vmem_to_hbm [thread:$0]  %s762, 128, %s4, [#allocation4]
    $region29: #{tpu_custom_call.1} parent=1 // pred_fallthru
      _
    // Predicated region
    $region30: #{tpu_custom_call.1} parent=1 // pred_check
      _
    $region31: #{tpu_custom_call.1} parent=1 // pred_check_branch
      %766 = sbr.rel (0) target = $region33
    $region32: #{tpu_custom_call.1} parent=1 // pred_region
      %767 = dma.done [#allocation4], 128
    $region33: #{tpu_custom_call.1} parent=1 // pred_fallthru
      _
    %768 = vsyncpa [#allocation3], 1
    %769 = vsyncpa [#allocation6], 1
    %770 = vsyncpa [#allocation4], 1

</llo_original>
